<compile_context>
chip_gen: v7x
topology: tpu7x:2x2x1
jax: 0.10.0
libtpu: 0.0.40
codegen_flags: <defaults>
</compile_context>

<pallas_src>
import functools

import jax
import jax.numpy as jnp
from jax import lax
from jax.experimental import pallas as pl
from jax.experimental.pallas import tpu as pltpu


def _pick_tile(total: int, target: int) -> int:
    """Largest multiple-of-8 divisor of `total` that is <= target, else `total`."""
    if total <= target:
        return total
    best = 0
    t = 8
    while t <= target:
        if total % t == 0:
            best = t
        t += 8
    return best if best > 0 else total


# ----------------------------------------------------------------------------
# Fused kernel: projection + normalize + pairwise squared-diff partial sums
# ----------------------------------------------------------------------------
def _fused_kernel(x_ref, w1_ref, b1_ref, w2_ref, b2_ref, psum_ref, *, k, h_chunk):
    """One grid cell = all k environment groups of one (sample j, pixel tile).

    x_ref   : (1, k, tile_hw, C)  f32
    w1_ref  : (C, H1)             bf16  (Buffered(1), grid-invariant resident)
    b1_ref  : (1, H1)             f32
    w2_ref  : (H1, Dp)            bf16
    b2_ref  : (1, Dp)             f32
    psum_ref: (1, 1, 1, Dp)       f32   lane-dense per-tile partial sums
    """
    tile_hw = x_ref.shape[2]
    H1 = w1_ref.shape[1]
    Dp = w2_ref.shape[1]
    n_chunks = H1 // h_chunk

    def project(xg_f32):
        # 1x1 conv == row matmul over channels; bf16 on the MXU, f32 accumulate.
        xg = xg_f32.astype(jnp.bfloat16)                       # (tile_hw, C)
        acc = jnp.zeros((tile_hw, Dp), jnp.float32)
        for c in range(n_chunks):                              # static hidden chunking
            lo = c * h_chunk
            hi = lo + h_chunk
            h = jnp.dot(xg, w1_ref[:, lo:hi],
                        preferred_element_type=jnp.float32)    # (tile_hw, h_chunk)
            h = jnp.maximum(h + b1_ref[:, lo:hi], 0.0)         # bias + ReLU in f32
            acc = acc + jnp.dot(h.astype(jnp.bfloat16), w2_ref[lo:hi, :],
                                preferred_element_type=jnp.float32)
        y = acc + b2_ref[...]                                   # (tile_hw, Dp) f32
        # F.normalize(dim=channel): y / max(||y||, 1e-12)
        ss = jnp.sum(y * y, axis=-1, keepdims=True)
        return y * lax.rsqrt(jnp.maximum(ss, 1e-24))

    y0 = project(x_ref[0, 0])                                   # environment group 0
    part = jnp.zeros((1, Dp), jnp.float32)
    for i in range(1, k):                                       # k is static & small
        d = y0 - project(x_ref[0, i])
        part = part + jnp.sum(d * d, axis=0, keepdims=True)     # sublane-only reduce
    psum_ref[...] = part.reshape(1, 1, 1, Dp)


def _partial_sums(x_groups, w1_bf16, b1, w2_bf16, b2, *, k, tile_hw, h_chunk,
                  vmem_limit_bytes):
    G, _, HW, C = x_groups.shape
    H1 = w1_bf16.shape[1]
    Dp = w2_bf16.shape[1]
    T = HW // tile_hw
    const = pl.Buffered(1)   # grid-invariant weights/biases: single VMEM buffer
    return pl.pallas_call(
        functools.partial(_fused_kernel, k=k, h_chunk=h_chunk),
        out_shape=jax.ShapeDtypeStruct((G, T, 1, Dp), jnp.float32),
        grid_spec=pltpu.PrefetchScalarGridSpec(
            num_scalar_prefetch=0,
            grid=(G, T),
            in_specs=[
                pl.BlockSpec((1, k, tile_hw, C), lambda g, t: (g, 0, t, 0)),
                pl.BlockSpec((C, H1), lambda g, t: (0, 0), pipeline_mode=const),
                pl.BlockSpec((1, H1), lambda g, t: (0, 0), pipeline_mode=const),
                pl.BlockSpec((H1, Dp), lambda g, t: (0, 0), pipeline_mode=const),
                pl.BlockSpec((1, Dp), lambda g, t: (0, 0), pipeline_mode=const),
            ],
            out_specs=pl.BlockSpec((1, 1, 1, Dp), lambda g, t: (g, t, 0, 0)),
        ),
        compiler_params=pltpu.CompilerParams(
            dimension_semantics=("parallel", "parallel"),   # megacore-friendly
            vmem_limit_bytes=vmem_limit_bytes,
        ),
    )(x_groups, w1_bf16, b1, w2_bf16, b2)


# ----------------------------------------------------------------------------
# Forward pass glue (matches Local_Alignment_Loss.forward semantics)
# ----------------------------------------------------------------------------
def local_alignment_loss(x_nchw, w1, b1, w2, b2, *, k, rows_per_step=512,
                         vmem_limit_bytes=64 * 1024 * 1024):
    assert k >= 2, "k must be >= 2"
    N, C, H, W = x_nchw.shape
    assert N % k == 0, "batch must be divisible by k (DomainBed minibatch layout)"
    G = N // k
    HW = H * W
    H1 = w1.shape[1]
    Dp = w2.shape[1]

    # TODO(synk): fold this NCHW->NHWC transpose into the producer to save an
    # HBM pass.  The reshape to (G, k, HW, C) is free metadata: row n*HW + hw
    # with n = j*k + g, so group g == samples with n % k == g, order preserved
    # (matches the module's contrast_list construction).
    x_groups = jnp.transpose(x_nchw, (0, 2, 3, 1)).reshape(G, k, HW, C)

    # bf16 weights halve weight DMA/VMEM; matmuls still accumulate in f32.
    w1_bf16 = w1.astype(jnp.bfloat16)
    w2_bf16 = w2.astype(jnp.bfloat16)

    # ~rows_per_step rows of MXU work per grid step (k groups per step).
    # Tune rows_per_step / vmem_limit_bytes per generation (v7x: 64 MiB VMEM).
    tile_hw = _pick_tile(HW, max(8, rows_per_step // k))
    # Chunk the hidden dim so the (rows, hidden) f32 intermediate stays small.
    h_chunk = 512 if (H1 > 512 and H1 % 512 == 0) else H1

    psums = _partial_sums(x_groups, w1_bf16, b1, w2_bf16, b2, k=k,
                          tile_hw=tile_hw, h_chunk=h_chunk,
                          vmem_limit_bytes=vmem_limit_bytes)

    # sum_i MSE(group0, group_i) / (k-1); each MSE mean is over G*HW*Dp elems.
    denom = jnp.float32((k - 1) * G * HW * Dp)
    return jnp.sum(psums) / denom


# ----------------------------------------------------------------------------
# Pure-JAX references
# ----------------------------------------------------------------------------
def reference_loss_f32(x_nchw, w1, b1, w2, b2, *, k):
    # Mirrors the PyTorch module in f32.
    xr = jnp.transpose(x_nchw, (0, 2, 3, 1))
    h = jnp.maximum(jnp.einsum("nhwc,cd->nhwd", xr, w1) + b1[0], 0.0)
    y = jnp.einsum("nhwd,de->nhwe", h, w2) + b2[0]
    norm = jnp.sqrt(jnp.sum(y * y, axis=-1, keepdims=True))
    y = y / jnp.maximum(norm, 1e-12)
    g0 = y[0::k]
    loss = jnp.float32(0.0)
    for i in range(1, k):
        loss = loss + jnp.mean((g0 - y[i::k]) ** 2)
    return loss / (k - 1)


def reference_loss_matched(x_nchw, w1, b1, w2, b2, *, k):
    # Mirrors the kernel's bf16-matmul / f32-accumulate / rsqrt numerics.
    xr = jnp.transpose(x_nchw, (0, 2, 3, 1)).astype(jnp.bfloat16)
    h = jnp.einsum("nhwc,cd->nhwd", xr, w1.astype(jnp.bfloat16),
                   preferred_element_type=jnp.float32)
    h = jnp.maximum(h + b1[0], 0.0).astype(jnp.bfloat16)
    y = jnp.einsum("nhwd,de->nhwe", h, w2.astype(jnp.bfloat16),
                   preferred_element_type=jnp.float32) + b2[0]
    ss = jnp.sum(y * y, axis=-1, keepdims=True)
    y = y * lax.rsqrt(jnp.maximum(ss, 1e-24))
    g0 = y[0::k]
    loss = jnp.float32(0.0)
    for i in range(1, k):
        loss = loss + jnp.mean((g0 - y[i::k]) ** 2)
    return loss / (k - 1)


def init_params(key, channel, hidden, proj):
    # Deterministic synthetic init (real module: Conv2d kaiming_uniform).
    k1, k2, k3, k4 = jax.random.split(key, 4)
    w1 = jax.random.normal(k1, (channel, hidden), jnp.float32) / jnp.sqrt(channel)
    b1 = jax.random.normal(k2, (1, hidden), jnp.float32) * 0.01
    w2 = jax.random.normal(k3, (hidden, proj), jnp.float32) / jnp.sqrt(hidden)
    b2 = jax.random.normal(k4, (1, proj), jnp.float32) * 0.01
    return w1, b1, w2, b2


if __name__ == "__main__":
    # Small, module-consistent shapes (real module: channel=512/2048,
    # hidden=2048, proj=hparams['local_projection_size'], k=hparams['k']).
    N, C, H, W = 4, 128, 8, 8
    HIDDEN, PROJ = 256, 128
    K = 2

    key = jax.random.PRNGKey(0)
    kx, kp = jax.random.split(key)
    x = jax.random.normal(kx, (N, C, H, W), jnp.float32)
    w1, b1, w2, b2 = init_params(kp, C, HIDDEN, PROJ)

    loss = jax.block_until_ready(
        jax.jit(functools.partial(local_alignment_loss, k=K))(x, w1, b1, w2, b2))
    ref_m = jax.block_until_ready(
        jax.jit(functools.partial(reference_loss_matched, k=K))(x, w1, b1, w2, b2))
    ref_f = jax.block_until_ready(
        jax.jit(functools.partial(reference_loss_f32, k=K))(x, w1, b1, w2, b2))

    # Tight check against the precision-matched reference (kernel plumbing),
    # loose check against the f32 reference (bf16 matmul rounding).
    assert jnp.allclose(loss, ref_m, rtol=5e-3, atol=1e-5), (loss, ref_m)
    assert jnp.allclose(loss, ref_f, rtol=3e-2, atol=1e-4), (loss, ref_f)
    print("KERNEL_OK")
</pallas_src>

<mosaic_0001>
module attributes {stable_mosaic.version = 11 : i64} {
  func.func @_fused_kernel(%arg0: i32, %arg1: i32, %arg2: memref<1x2x64x128xf32, #tpu.memory_space<vmem>>, %arg3: memref<128x256xbf16, #tpu.memory_space<vmem>>, %arg4: memref<1x256xf32, #tpu.memory_space<vmem>>, %arg5: memref<256x128xbf16, #tpu.memory_space<vmem>>, %arg6: memref<1x128xf32, #tpu.memory_space<vmem>>, %arg7: memref<1x1x1x128xf32, #tpu.memory_space<vmem>>) attributes {dimension_semantics = [#tpu.dimension_semantics<parallel>, #tpu.dimension_semantics<parallel>], iteration_bounds = array<i64: 2, 1>, scalar_prefetch = 0 : i64, scratch_operands = 0 : i64, tpu.core_type = #tpu.core_type<tc>, window_params = [{transform_indices = @transform_0, window_bounds = array<i64: 1, 2, 64, 128>}, {pipeline_mode = #tpu.pipeline_mode<synchronous>, transform_indices = @transform_1, window_bounds = array<i64: 128, 256>}, {pipeline_mode = #tpu.pipeline_mode<synchronous>, transform_indices = @transform_2, window_bounds = array<i64: 1, 256>}, {pipeline_mode = #tpu.pipeline_mode<synchronous>, transform_indices = @transform_3, window_bounds = array<i64: 256, 128>}, {pipeline_mode = #tpu.pipeline_mode<synchronous>, transform_indices = @transform_4, window_bounds = array<i64: 1, 128>}, {transform_indices = @transform_5, window_bounds = array<i64: 1, 1, 1, 128>}]} {
    %c0 = arith.constant 0 : index
    %c0_0 = arith.constant 0 : index
    %c0_1 = arith.constant 0 : index
    %c0_2 = arith.constant 0 : index
    %0 = vector.load %arg2[%c0, %c0_0, %c0_1, %c0_2] : memref<1x2x64x128xf32, #tpu.memory_space<vmem>>, vector<1x1x64x128xf32>
    %1 = vector.shape_cast %0 : vector<1x1x64x128xf32> to vector<64x128xf32>
    %2 = arith.truncf %1 : vector<64x128xf32> to vector<64x128xbf16>
    %cst = arith.constant 0.000000e+00 : f32
    %3 = vector.broadcast %cst : f32 to vector<64x128xf32>
    %c0_3 = arith.constant 0 : index
    %c0_4 = arith.constant 0 : index
    %4 = vector.load %arg3[%c0_3, %c0_4] : memref<128x256xbf16, #tpu.memory_space<vmem>>, vector<128x256xbf16>
    %cst_5 = arith.constant dense<0.000000e+00> : vector<64x256xf32>
    %5 = tpu.matmul %2, %4, %cst_5 {dimension_numbers = #tpu.dot_dimension_numbers<[1], [0], [0], [1], [0, 0, 1, 1], [], []>} : vector<64x128xbf16>, vector<128x256xbf16>, vector<64x256xf32> -> vector<64x256xf32>
    %c0_6 = arith.constant 0 : index
    %c0_7 = arith.constant 0 : index
    %6 = vector.load %arg4[%c0_6, %c0_7] : memref<1x256xf32, #tpu.memory_space<vmem>>, vector<1x256xf32>
    %7 = vector.broadcast %6 : vector<1x256xf32> to vector<64x256xf32>
    %8 = arith.addf %5, %7 : vector<64x256xf32>
    %cst_8 = arith.constant 0.000000e+00 : f32
    %9 = vector.broadcast %cst_8 : f32 to vector<64x256xf32>
    %10 = arith.maximumf %8, %9 : vector<64x256xf32>
    %11 = arith.truncf %10 : vector<64x256xf32> to vector<64x256xbf16>
    %c0_9 = arith.constant 0 : index
    %c0_10 = arith.constant 0 : index
    %12 = vector.load %arg5[%c0_9, %c0_10] : memref<256x128xbf16, #tpu.memory_space<vmem>>, vector<256x128xbf16>
    %cst_11 = arith.constant dense<0.000000e+00> : vector<64x128xf32>
    %13 = tpu.matmul %11, %12, %cst_11 {dimension_numbers = #tpu.dot_dimension_numbers<[1], [0], [0], [1], [0, 0, 1, 1], [], []>} : vector<64x256xbf16>, vector<256x128xbf16>, vector<64x128xf32> -> vector<64x128xf32>
    %14 = arith.addf %3, %13 : vector<64x128xf32>
    %c0_12 = arith.constant 0 : index
    %c0_13 = arith.constant 0 : index
    %15 = vector.load %arg6[%c0_12, %c0_13] : memref<1x128xf32, #tpu.memory_space<vmem>>, vector<1x128xf32>
    %16 = vector.broadcast %15 : vector<1x128xf32> to vector<64x128xf32>
    %17 = arith.addf %14, %16 : vector<64x128xf32>
    %18 = arith.mulf %17, %17 : vector<64x128xf32>
    %cst_14 = arith.constant dense<0.000000e+00> : vector<64xf32>
    %19 = vector.multi_reduction <add>, %18, %cst_14 [1] : vector<64x128xf32> to vector<64xf32>
    %20 = vector.shape_cast %19 : vector<64xf32> to vector<64x1xf32>
    %cst_15 = arith.constant 1.000000e-24 : f32
    %21 = vector.broadcast %cst_15 : f32 to vector<64x1xf32>
    %22 = arith.maximumf %20, %21 : vector<64x1xf32>
    %23 = math.rsqrt %22 : vector<64x1xf32>
    %24 = vector.broadcast %23 : vector<64x1xf32> to vector<64x128xf32>
    %25 = arith.mulf %17, %24 : vector<64x128xf32>
    %cst_16 = arith.constant 0.000000e+00 : f32
    %26 = vector.broadcast %cst_16 : f32 to vector<1x128xf32>
    %c0_17 = arith.constant 0 : index
    %c1 = arith.constant 1 : index
    %c0_18 = arith.constant 0 : index
    %c0_19 = arith.constant 0 : index
    %27 = vector.load %arg2[%c0_17, %c1, %c0_18, %c0_19] : memref<1x2x64x128xf32, #tpu.memory_space<vmem>>, vector<1x1x64x128xf32>
    %28 = vector.shape_cast %27 : vector<1x1x64x128xf32> to vector<64x128xf32>
    %29 = arith.truncf %28 : vector<64x128xf32> to vector<64x128xbf16>
    %cst_20 = arith.constant 0.000000e+00 : f32
    %30 = vector.broadcast %cst_20 : f32 to vector<64x128xf32>
    %c0_21 = arith.constant 0 : index
    %c0_22 = arith.constant 0 : index
    %31 = vector.load %arg3[%c0_21, %c0_22] : memref<128x256xbf16, #tpu.memory_space<vmem>>, vector<128x256xbf16>
    %cst_23 = arith.constant dense<0.000000e+00> : vector<64x256xf32>
    %32 = tpu.matmul %29, %31, %cst_23 {dimension_numbers = #tpu.dot_dimension_numbers<[1], [0], [0], [1], [0, 0, 1, 1], [], []>} : vector<64x128xbf16>, vector<128x256xbf16>, vector<64x256xf32> -> vector<64x256xf32>
    %c0_24 = arith.constant 0 : index
    %c0_25 = arith.constant 0 : index
    %33 = vector.load %arg4[%c0_24, %c0_25] : memref<1x256xf32, #tpu.memory_space<vmem>>, vector<1x256xf32>
    %34 = vector.broadcast %33 : vector<1x256xf32> to vector<64x256xf32>
    %35 = arith.addf %32, %34 : vector<64x256xf32>
    %cst_26 = arith.constant 0.000000e+00 : f32
    %36 = vector.broadcast %cst_26 : f32 to vector<64x256xf32>
    %37 = arith.maximumf %35, %36 : vector<64x256xf32>
    %38 = arith.truncf %37 : vector<64x256xf32> to vector<64x256xbf16>
    %c0_27 = arith.constant 0 : index
    %c0_28 = arith.constant 0 : index
    %39 = vector.load %arg5[%c0_27, %c0_28] : memref<256x128xbf16, #tpu.memory_space<vmem>>, vector<256x128xbf16>
    %cst_29 = arith.constant dense<0.000000e+00> : vector<64x128xf32>
    %40 = tpu.matmul %38, %39, %cst_29 {dimension_numbers = #tpu.dot_dimension_numbers<[1], [0], [0], [1], [0, 0, 1, 1], [], []>} : vector<64x256xbf16>, vector<256x128xbf16>, vector<64x128xf32> -> vector<64x128xf32>
    %41 = arith.addf %30, %40 : vector<64x128xf32>
    %c0_30 = arith.constant 0 : index
    %c0_31 = arith.constant 0 : index
    %42 = vector.load %arg6[%c0_30, %c0_31] : memref<1x128xf32, #tpu.memory_space<vmem>>, vector<1x128xf32>
    %43 = vector.broadcast %42 : vector<1x128xf32> to vector<64x128xf32>
    %44 = arith.addf %41, %43 : vector<64x128xf32>
    %45 = arith.mulf %44, %44 : vector<64x128xf32>
    %cst_32 = arith.constant dense<0.000000e+00> : vector<64xf32>
    %46 = vector.multi_reduction <add>, %45, %cst_32 [1] : vector<64x128xf32> to vector<64xf32>
    %47 = vector.shape_cast %46 : vector<64xf32> to vector<64x1xf32>
    %cst_33 = arith.constant 1.000000e-24 : f32
    %48 = vector.broadcast %cst_33 : f32 to vector<64x1xf32>
    %49 = arith.maximumf %47, %48 : vector<64x1xf32>
    %50 = math.rsqrt %49 : vector<64x1xf32>
    %51 = vector.broadcast %50 : vector<64x1xf32> to vector<64x128xf32>
    %52 = arith.mulf %44, %51 : vector<64x128xf32>
    %53 = arith.subf %25, %52 : vector<64x128xf32>
    %54 = arith.mulf %53, %53 : vector<64x128xf32>
    %cst_34 = arith.constant dense<0.000000e+00> : vector<128xf32>
    %55 = vector.multi_reduction <add>, %54, %cst_34 [0] : vector<64x128xf32> to vector<128xf32>
    %56 = vector.shape_cast %55 : vector<128xf32> to vector<1x128xf32>
    %57 = arith.addf %26, %56 : vector<1x128xf32>
    %58 = vector.shape_cast %57 : vector<1x128xf32> to vector<1x1x1x128xf32>
    %c0_35 = arith.constant 0 : index
    %c0_36 = arith.constant 0 : index
    %c0_37 = arith.constant 0 : index
    %c0_38 = arith.constant 0 : index
    %59 = vector.load %arg7[%c0_35, %c0_36, %c0_37, %c0_38] : memref<1x1x1x128xf32, #tpu.memory_space<vmem>>, vector<1x1x1x128xf32>
    tpu.vector_store %arg7[%c0_35, %c0_36, %c0_37, %c0_38], %58 {strides = array<i32>} : memref<1x1x1x128xf32, #tpu.memory_space<vmem>>, vector<1x1x1x128xf32>,
    return
  }
  func.func @transform_0(%arg0: i32, %arg1: i32) -> (i32, i32, i32, i32) {
    %c0_i32 = arith.constant 0 : i32
    %c0_i32_0 = arith.constant 0 : i32
    %c0_i32_1 = arith.constant 0 : i32
    return %arg0, %c0_i32, %arg1, %c0_i32_0 : i32, i32, i32, i32
  }
  func.func @transform_1(%arg0: i32, %arg1: i32) -> (i32, i32) {
    %c0_i32 = arith.constant 0 : i32
    %c0_i32_0 = arith.constant 0 : i32
    %c0_i32_1 = arith.constant 0 : i32
    return %c0_i32, %c0_i32_0 : i32, i32
  }
  func.func @transform_2(%arg0: i32, %arg1: i32) -> (i32, i32) {
    %c0_i32 = arith.constant 0 : i32
    %c0_i32_0 = arith.constant 0 : i32
    %c0_i32_1 = arith.constant 0 : i32
    return %c0_i32, %c0_i32_0 : i32, i32
  }
  func.func @transform_3(%arg0: i32, %arg1: i32) -> (i32, i32) {
    %c0_i32 = arith.constant 0 : i32
    %c0_i32_0 = arith.constant 0 : i32
    %c0_i32_1 = arith.constant 0 : i32
    return %c0_i32, %c0_i32_0 : i32, i32
  }
  func.func @transform_4(%arg0: i32, %arg1: i32) -> (i32, i32) {
    %c0_i32 = arith.constant 0 : i32
    %c0_i32_0 = arith.constant 0 : i32
    %c0_i32_1 = arith.constant 0 : i32
    return %c0_i32, %c0_i32_0 : i32, i32
  }
  func.func @transform_5(%arg0: i32, %arg1: i32) -> (i32, i32, i32, i32) {
    %c0_i32 = arith.constant 0 : i32
    %c0_i32_0 = arith.constant 0 : i32
    %c0_i32_1 = arith.constant 0 : i32
    return %arg0, %arg1, %c0_i32, %c0_i32_0 : i32, i32, i32, i32
  }
}

</mosaic_0001>

<llo_original>
// kernel: local_alignment_loss.1
$region0: #{local_alignment_loss.1}
  #allocation0 [shape = 'u32[]', space=smem, size = 0x4, offset = 0x4, fixed_abs, tag = 'smem constant byte address 0x4 - core index']
  #allocation1 [shape = 'u32[144,128]{1,0:T(1,128)}', space=vmem, size = 0x12000, scoped, tag = 'internal scratch']
  %s0 = inlined_call_operand.hbm [shape: f32[2,2,64,128], index: 0, kind: input, shape index: {}]
  %s1 = inlined_call_operand.hbm [shape: bf16[128,256], index: 1, kind: input, shape index: {}]
  %s2 = inlined_call_operand.hbm [shape: f32[1,256], index: 2, kind: input, shape index: {}]
  %s3 = inlined_call_operand.hbm [shape: bf16[256,128], index: 3, kind: input, shape index: {}]
  %s4 = inlined_call_operand.hbm [shape: f32[1,128], index: 4, kind: input, shape index: {}]
  %s5 = inlined_call_operand.hbm [shape: f32[2,1,1,128], index: 5, kind: output, shape index: {}]
  %s6 = sld [smem:[#allocation0]]
  $region73: #{local_alignment_loss.1} parent=0
    _
  %s8 = ssub.s32 1, %s6
  %s9 = scalar_select 0, %s8, %s6
  $region1: #{local_alignment_loss.1} parent=0
    #allocation2 [shape = 'u8[131072]{0}', space=vmem, size = 0x20000, scoped, tag = 'input window, operand 0']
    #allocation3 [shape = 's32[2]{0}', space=sflag, size = 0x8, scoped, tag = 'scoped memory for local_alignment_loss.1']
    #allocation4 [shape = 's32[2]{0}', space=sflag, size = 0x8, scoped, tag = 'scoped memory for local_alignment_loss.1']
    #allocation5 [shape = 'u8[65536]{0}', space=vmem, size = 0x10000, scoped, tag = 'input window, operand 1, single buffered']
    #allocation6 [shape = 's32[1]{0}', space=sflag, size = 0x4, scoped, tag = 'scoped memory for local_alignment_loss.1']
    #allocation7 [shape = 'u8[1024]{0}', space=vmem, size = 0x400, scoped, tag = 'input window, operand 2, single buffered']
    #allocation8 [shape = 'u8[65536]{0}', space=vmem, size = 0x10000, scoped, tag = 'input window, operand 3, single buffered']
    #allocation9 [shape = 's32[1]{0}', space=sflag, size = 0x4, scoped, tag = 'scoped memory for local_alignment_loss.1']
    #allocation10 [shape = 'u8[512]{0}', space=vmem, size = 0x400, scoped, tag = 'input window, operand 4, single buffered']
    #allocation11 [shape = 'u8[1024]{0}', space=vmem, size = 0x400, scoped, tag = 'output window, operand 0']
    %10 = vsyncpa [#allocation3], 0
    %s11 = scalar_lea.sflag [#allocation3], 1
    %12 = vsyncpa %s11, 0
    %13 = vsyncpa [#allocation6], 0
    %14 = vsyncpa [#allocation9], 0
    %15 = vsyncpa [#allocation4], 0
    %s16 = scalar_lea.sflag [#allocation4], 1
    %17 = vsyncpa %s16, 0
    loop: start=0, step=1, limit=4
    $region2: #{local_alignment_loss.1} parent=1 // loop_pre_header
      _
    $region3: #{local_alignment_loss.1} parent=1 // loop_header
      %s19 = sphi 0, %s23
      %p20 = scmp.ge.s32.totalorder %s19, 4
      %s26 = sphi 0, %s38
      %s27 = sphi 0, %s34
      %s28 = sphi 0, %s26
      %s29 = sphi 0, %s27
      %s30 = sphi 0, %s28
      %s31 = sphi 0, %s29
      %s43 = sphi 0, %s45
      %s46 = sphi 0, %s43
      %s47 = sphi 0, %s46
      %s63 = sphi 0, %s47
      %s67 = sphi 0, %s67
      %s69 = sphi 0, %s67
      %s70 = sphi 0, %s69
      %s84 = sphi 0, %s70
      %s88 = sphi 0, %s88
      %s90 = sphi 0, %s88
      %s91 = sphi 0, %s90
      %s105 = sphi 0, %s91
      %s109 = sphi 0, %s109
      %s111 = sphi 0, %s109
      %s112 = sphi 0, %s111
      %s126 = sphi 0, %s112
      %s130 = sphi 0, %s130
      %s132 = sphi 0, %s130
      %s133 = sphi 0, %s132
      %s147 = sphi 0, %s133
      %s155 = sphi 0, %s157
      %s158 = sphi 0, %s155
      %s159 = sphi 0, %s158
      %s175 = sphi 0, %s159
    $region4: #{local_alignment_loss.1} parent=1 // loop_header_branch
      %22 = sbr.rel (%p20) target = $region8
    $region5: #{local_alignment_loss.1} parent=1 // loop_body
      %s24 = ssub.s32 %s19, 1
      %s25 = ssub.s32 %s19, 2
      %s32 = sadd.s32 1, %s27
      %p33 = scmp.ge.s32.totalorder %s32, 1
      %s34 = scalar_select %p33, 0, %s32
      %s35 = sadd.s32 1, %s26
      %s36 = scalar_select %p33, %s35, %s26
      %p37 = scmp.ge.s32.totalorder %s36, 2
      %s38 = scalar_select %p37, 0, %s36
      %s39 = ssub.s32 %s26, %s38
      %s40 = ssub.s32 %s27, %s34
      %s41 = sor.u32 %s39, %s40
      %p42 = scmp.eq.s32.totalorder %s41, 0
      %s44 = sadd.s32 %s43, 1
      %s45 = scalar_select %p42, %s43, %s44
      %p48 = pneg %p42
      %p49 = scmp.eq.s32.totalorder %s19, 1
      %p50 = por %p48, %p49
      %p51 = scmp.ne.s32.totalorder %s43, %s46
      %p52 = scmp.eq.s32.totalorder %s19, 0
      %p53 = por %p51, %p52
      %p54 = scmp.ne.s32.totalorder %s43, %s46
      %p55 = scmp.eq.s32.totalorder %s24, 1
      %p56 = por %p54, %p55
      %p57 = scmp.ne.s32.totalorder %s46, %s47
      %p58 = scmp.eq.s32.totalorder %s24, 0
      %p59 = por %p57, %p58
      %p60 = scmp.ne.s32.totalorder %s46, %s47
      %p61 = scmp.eq.s32.totalorder %s25, 1
      %p62 = por %p60, %p61
      %p64 = scmp.ne.s32.totalorder %s47, %s63
      %p65 = scmp.eq.s32.totalorder %s25, 0
      %p66 = por %p64, %p65
      %s68 = sadd.s32 %s67, 1
      %p71 = scmp.eq.s32.totalorder %s19, 1
      %p72 = scmp.ne.s32.totalorder %s67, %s69
      %p73 = scmp.eq.s32.totalorder %s19, 0
      %p74 = por %p72, %p73
      %p75 = scmp.ne.s32.totalorder %s67, %s69
      %p76 = scmp.eq.s32.totalorder %s24, 1
      %p77 = por %p75, %p76
      %p78 = scmp.ne.s32.totalorder %s69, %s70
      %p79 = scmp.eq.s32.totalorder %s24, 0
      %p80 = por %p78, %p79
      %p81 = scmp.ne.s32.totalorder %s69, %s70
      %p82 = scmp.eq.s32.totalorder %s25, 1
      %p83 = por %p81, %p82
      %p85 = scmp.ne.s32.totalorder %s70, %s84
      %p86 = scmp.eq.s32.totalorder %s25, 0
      %p87 = por %p85, %p86
      %s89 = sadd.s32 %s88, 1
      %p92 = scmp.eq.s32.totalorder %s19, 1
      %p93 = scmp.ne.s32.totalorder %s88, %s90
      %p94 = scmp.eq.s32.totalorder %s19, 0
      %p95 = por %p93, %p94
      %p96 = scmp.ne.s32.totalorder %s88, %s90
      %p97 = scmp.eq.s32.totalorder %s24, 1
      %p98 = por %p96, %p97
      %p99 = scmp.ne.s32.totalorder %s90, %s91
      %p100 = scmp.eq.s32.totalorder %s24, 0
      %p101 = por %p99, %p100
      %p102 = scmp.ne.s32.totalorder %s90, %s91
      %p103 = scmp.eq.s32.totalorder %s25, 1
      %p104 = por %p102, %p103
      %p106 = scmp.ne.s32.totalorder %s91, %s105
      %p107 = scmp.eq.s32.totalorder %s25, 0
      %p108 = por %p106, %p107
      %s110 = sadd.s32 %s109, 1
      %p113 = scmp.eq.s32.totalorder %s19, 1
      %p114 = scmp.ne.s32.totalorder %s109, %s111
      %p115 = scmp.eq.s32.totalorder %s19, 0
      %p116 = por %p114, %p115
      %p117 = scmp.ne.s32.totalorder %s109, %s111
      %p118 = scmp.eq.s32.totalorder %s24, 1
      %p119 = por %p117, %p118
      %p120 = scmp.ne.s32.totalorder %s111, %s112
      %p121 = scmp.eq.s32.totalorder %s24, 0
      %p122 = por %p120, %p121
      %p123 = scmp.ne.s32.totalorder %s111, %s112
      %p124 = scmp.eq.s32.totalorder %s25, 1
      %p125 = por %p123, %p124
      %p127 = scmp.ne.s32.totalorder %s112, %s126
      %p128 = scmp.eq.s32.totalorder %s25, 0
      %p129 = por %p127, %p128
      %s131 = sadd.s32 %s130, 1
      %p134 = scmp.eq.s32.totalorder %s19, 1
      %p135 = scmp.ne.s32.totalorder %s130, %s132
      %p136 = scmp.eq.s32.totalorder %s19, 0
      %p137 = por %p135, %p136
      %p138 = scmp.ne.s32.totalorder %s130, %s132
      %p139 = scmp.eq.s32.totalorder %s24, 1
      %p140 = por %p138, %p139
      %p141 = scmp.ne.s32.totalorder %s132, %s133
      %p142 = scmp.eq.s32.totalorder %s24, 0
      %p143 = por %p141, %p142
      %p144 = scmp.ne.s32.totalorder %s132, %s133
      %p145 = scmp.eq.s32.totalorder %s25, 1
      %p146 = por %p144, %p145
      %p148 = scmp.ne.s32.totalorder %s133, %s147
      %p149 = scmp.eq.s32.totalorder %s25, 0
      %p150 = por %p148, %p149
      %s151 = ssub.s32 %s26, %s38
      %s152 = ssub.s32 %s27, %s34
      %s153 = sor.u32 %s151, %s152
      %p154 = scmp.eq.s32.totalorder %s153, 0
      %s156 = sadd.s32 %s155, 1
      %s157 = scalar_select %p154, %s155, %s156
      %p160 = pneg %p154
      %p161 = scmp.eq.s32.totalorder %s19, 1
      %p162 = por %p160, %p161
      %p163 = scmp.ne.s32.totalorder %s155, %s158
      %p164 = scmp.eq.s32.totalorder %s19, 0
      %p165 = por %p163, %p164
      %p166 = scmp.ne.s32.totalorder %s155, %s158
      %p167 = scmp.eq.s32.totalorder %s24, 1
      %p168 = por %p166, %p167
      %p169 = scmp.ne.s32.totalorder %s158, %s159
      %p170 = scmp.eq.s32.totalorder %s24, 0
      %p171 = por %p169, %p170
      %p172 = scmp.ne.s32.totalorder %s158, %s159
      %p173 = scmp.eq.s32.totalorder %s25, 1
      %p174 = por %p172, %p173
      %p176 = scmp.ne.s32.totalorder %s159, %s175
      %p177 = scmp.eq.s32.totalorder %s25, 0
      %p178 = por %p176, %p177
      %p179 = scmp.le.s32.totalorder 1, %s19
      %p180 = scmp.lt.s32.totalorder %s19, 3
      %p181 = pnand %p179, %p180
      %p182 = pneg %p181
      // Predicated region
      $region9: #{local_alignment_loss.1} parent=5 // pred_check
        _
      $region10: #{local_alignment_loss.1} parent=5 // pred_check_branch
        %184 = sbr.rel (%p181) target = $region12
      $region11: #{local_alignment_loss.1} parent=5 // pred_region
        %s185 = ssub.s32 %s19, 1
        // Predicated region
        $region13: #{local_alignment_loss.1} parent=11 // pred_check
          %p186 = pneg %p80
        $region14: #{local_alignment_loss.1} parent=11 // pred_check_branch
          %188 = sbr.rel (%p186) target = $region16
        $region15: #{local_alignment_loss.1} parent=11 // pred_region
          %s190 = ssub.s32 2048, 2048
          %191 = vsyncadd [#allocation6], %s190
          %s192 = sshll.u32 [#allocation5], 4
          %s193 = int_to_ptr.vmem [resolvable:$true] %s192
          %198 = dma.hbm_to_vmem [thread:$0]  %s1, 2048, %s193, [#allocation6], 128, 128, 8
        $region16: #{local_alignment_loss.1} parent=11 // pred_fallthru
          _
        // Predicated region
        $region17: #{local_alignment_loss.1} parent=11 // pred_check
          %p199 = pneg %p101
        $region18: #{local_alignment_loss.1} parent=11 // pred_check_branch
          %201 = sbr.rel (%p199) target = $region20
        $region19: #{local_alignment_loss.1} parent=11 // pred_region
          %s203 = ssub.s32 32, 32
          %204 = vsyncadd [#allocation6], %s203
          %s206 = sshll.u32 [#allocation7], 4
          %s207 = int_to_ptr.vmem [resolvable:$true] %s206
          %209 = dma.hbm_to_vmem [thread:$0]  %s2, 32, %s207, [#allocation6]
        $region20: #{local_alignment_loss.1} parent=11 // pred_fallthru
          _
        // Predicated region
        $region21: #{local_alignment_loss.1} parent=11 // pred_check
          %p210 = pneg %p122
        $region22: #{local_alignment_loss.1} parent=11 // pred_check_branch
          %212 = sbr.rel (%p210) target = $region24
        $region23: #{local_alignment_loss.1} parent=11 // pred_region
          %s214 = ssub.s32 2048, 2048
          %215 = vsyncadd [#allocation9], %s214
          %s216 = sshll.u32 [#allocation8], 4
          %s217 = int_to_ptr.vmem [resolvable:$true] %s216
          %222 = dma.hbm_to_vmem [thread:$0]  %s3, 2048, %s217, [#allocation9], 64, 64, 4
        $region24: #{local_alignment_loss.1} parent=11 // pred_fallthru
          _
        // Predicated region
        $region25: #{local_alignment_loss.1} parent=11 // pred_check
          %p223 = pneg %p143
        $region26: #{local_alignment_loss.1} parent=11 // pred_check_branch
          %225 = sbr.rel (%p223) target = $region28
        $region27: #{local_alignment_loss.1} parent=11 // pred_region
          %s227 = ssub.s32 16, 16
          %228 = vsyncadd [#allocation9], %s227
          %s230 = sshll.u32 [#allocation10], 4
          %s231 = int_to_ptr.vmem [resolvable:$true] %s230
          %233 = dma.hbm_to_vmem [thread:$0]  %s4, 16, %s231, [#allocation9]
        $region28: #{local_alignment_loss.1} parent=11 // pred_fallthru
          _
      $region12: #{local_alignment_loss.1} parent=5 // pred_fallthru
        _
      %p234 = scmp.lt.s32.totalorder %s19, 2
      // Predicated region
      $region29: #{local_alignment_loss.1} parent=5 // pred_check
        %p235 = pneg %p234
      $region30: #{local_alignment_loss.1} parent=5 // pred_check_branch
        %237 = sbr.rel (%p235) target = $region32
      $region31: #{local_alignment_loss.1} parent=5 // pred_region
        // Predicated region
        $region33: #{local_alignment_loss.1} parent=31 // pred_check
          %p238 = pneg %p53
        $region34: #{local_alignment_loss.1} parent=31 // pred_check_branch
          %240 = sbr.rel (%p238) target = $region36
        $region35: #{local_alignment_loss.1} parent=31 // pred_region
          %s241 = sand.u32 %s43, 1
          %s242 = scalar_lea.sflag [#allocation3], %s241
          %s243 = sand.u32 %s43, 1
          %s244 = smul.addr %s243, 128
          %s245 = scalar_lea.vmem [#allocation2], %s244
          %s246 = smul.u32 8, %s27
          %s248 = ssub.s32 2048, 2048
          %249 = vsyncadd %s242, %s248
          %s250 = smul.addr %s26, 16
          %s251 = sadd.s32 %s246, %s250
          %s252 = smul.addr %s251, 128
          %s253 = scalar_lea.hbm %s0, %s252
          %s254 = sshll.u32 %s245, 4
          %s255 = int_to_ptr.vmem [resolvable:$true] %s254
          %260 = dma.hbm_to_vmem [thread:$0]  %s253, 2048, %s255, %s242, 128, 128, 8
        $region36: #{local_alignment_loss.1} parent=31 // pred_fallthru
          _
      $region32: #{local_alignment_loss.1} parent=5 // pred_fallthru
        _
      %p261 = scmp.le.s32.totalorder 1, %s19
      %p262 = scmp.lt.s32.totalorder %s19, 3
      %p263 = pnand %p261, %p262
      %p264 = pneg %p263
      // Predicated region
      $region37: #{local_alignment_loss.1} parent=5 // pred_check
        _
      $region38: #{local_alignment_loss.1} parent=5 // pred_check_branch
        %266 = sbr.rel (%p263) target = $region40
      $region39: #{local_alignment_loss.1} parent=5 // pred_region
        %s267 = ssub.s32 %s19, 1
        %s268 = sand.u32 %s46, 1
        %s269 = scalar_lea.sflag [#allocation3], %s268
        %s270 = sand.u32 %s46, 1
        %s271 = smul.addr %s270, 128
        %s272 = scalar_lea.vmem [#allocation2], %s271
        // Predicated region
        $region41: #{local_alignment_loss.1} parent=39 // pred_check
          %p273 = pneg %p59
        $region42: #{local_alignment_loss.1} parent=39 // pred_check_branch
          %275 = sbr.rel (%p273) target = $region44
        $region43: #{local_alignment_loss.1} parent=39 // pred_region
          %276 = dma.done %s269, 2048
        $region44: #{local_alignment_loss.1} parent=39 // pred_fallthru
          _
        // Predicated region
        $region45: #{local_alignment_loss.1} parent=39 // pred_check
          %p277 = pneg %p80
        $region46: #{local_alignment_loss.1} parent=39 // pred_check_branch
          %279 = sbr.rel (%p277) target = $region48
        $region47: #{local_alignment_loss.1} parent=39 // pred_region
          %280 = dma.done [#allocation6], 2048
        $region48: #{local_alignment_loss.1} parent=39 // pred_fallthru
          _
        // Predicated region
        $region49: #{local_alignment_loss.1} parent=39 // pred_check
          %p281 = pneg %p101
        $region50: #{local_alignment_loss.1} parent=39 // pred_check_branch
          %283 = sbr.rel (%p281) target = $region52
        $region51: #{local_alignment_loss.1} parent=39 // pred_region
          %284 = dma.done [#allocation6], 32
        $region52: #{local_alignment_loss.1} parent=39 // pred_fallthru
          _
        // Predicated region
        $region53: #{local_alignment_loss.1} parent=39 // pred_check
          %p285 = pneg %p122
        $region54: #{local_alignment_loss.1} parent=39 // pred_check_branch
          %287 = sbr.rel (%p285) target = $region56
        $region55: #{local_alignment_loss.1} parent=39 // pred_region
          %288 = dma.done [#allocation9], 2048
        $region56: #{local_alignment_loss.1} parent=39 // pred_fallthru
          _
        // Predicated region
        $region57: #{local_alignment_loss.1} parent=39 // pred_check
          %p289 = pneg %p143
        $region58: #{local_alignment_loss.1} parent=39 // pred_check_branch
          %291 = sbr.rel (%p289) target = $region60
        $region59: #{local_alignment_loss.1} parent=39 // pred_region
          %292 = dma.done [#allocation9], 16
        $region60: #{local_alignment_loss.1} parent=39 // pred_fallthru
          _
        %s293 = sand.u32 %s46, 1
        %s294 = scalar_lea.sflag [#allocation3], %s293
        %s295 = sand.u32 %s46, 1
        %s296 = smul.addr %s295, 128
        %s297 = scalar_lea.vmem [#allocation2], %s296
        %p298 = pneg %p59
        %p299 = pneg %p56
        %p300 = pneg %p80
        %p301 = pneg %p77
        %p302 = pneg %p101
        %p303 = pneg %p98
        %p304 = pneg %p122
        %p305 = pneg %p119
        %p306 = pneg %p143
        %p307 = pneg %p140
        %p308 = pneg %p171
        %p309 = pneg %p168
        %s310 = sand.u32 %s158, 1
        %s311 = scalar_lea.sflag [#allocation4], %s310
        %s312 = sand.u32 %s158, 1
        %s313 = scalar_lea.vmem [#allocation11], %s312
        %s314 = smul.u32 8, %s29
        %v316 = vld [vmem:[%s272] sm:$0xff]
        %v317 = vld [vmem:[%s272 + $0x8] sm:$0xff]
        %v318 = vld [vmem:[%s272 + $0x10] sm:$0xff]
        %v319 = vld [vmem:[%s272 + $0x18] sm:$0xff]
        %v320 = vld [vmem:[%s272 + $0x20] sm:$0xff]
        %v321 = vld [vmem:[%s272 + $0x28] sm:$0xff]
        %v322 = vld [vmem:[%s272 + $0x30] sm:$0xff]
        %v323 = vld [vmem:[%s272 + $0x38] sm:$0xff]
        %v324 = vpack.c.bf16 %v317, %v316
        %v325 = vpack.c.bf16 %v319, %v318
        %v326 = vpack.c.bf16 %v321, %v320
        %v327 = vpack.c.bf16 %v323, %v322
        %v328 = vld [vmem:[#allocation5] sm:$0xff]
        %v329 = vld [vmem:[#allocation5 + $0x8] sm:$0xff]
        %v330 = vld [vmem:[#allocation5 + $0x10] sm:$0xff]
        %v331 = vld [vmem:[#allocation5 + $0x18] sm:$0xff]
        %v332 = vld [vmem:[#allocation5 + $0x20] sm:$0xff]
        %v333 = vld [vmem:[#allocation5 + $0x28] sm:$0xff]
        %v334 = vld [vmem:[#allocation5 + $0x30] sm:$0xff]
        %v335 = vld [vmem:[#allocation5 + $0x38] sm:$0xff]
        %v336 = vld [vmem:[#allocation5 + $0x40] sm:$0xff]
        %v337 = vld [vmem:[#allocation5 + $0x48] sm:$0xff]
        %v338 = vld [vmem:[#allocation5 + $0x50] sm:$0xff]
        %v339 = vld [vmem:[#allocation5 + $0x58] sm:$0xff]
        %v340 = vld [vmem:[#allocation5 + $0x60] sm:$0xff]
        %v341 = vld [vmem:[#allocation5 + $0x68] sm:$0xff]
        %v342 = vld [vmem:[#allocation5 + $0x70] sm:$0xff]
        %v343 = vld [vmem:[#allocation5 + $0x78] sm:$0xff]
        %v344 = vld [vmem:[#allocation7] sm:$0x3]
        %v346 = vlaneseq
        %v347 = vshrl.u32 %v346, 7
        %v348 = vsub.s32 0, %v347
        %v349 = vrot.slane %v344, %v348
        %v350 = vlaneseq
        %v351 = vshrl.u32 %v350, 7
        %v352 = vsub.s32 1, %v351
        %v353 = vrot.slane %v344, %v352
        %v372 = vunpack.c.l.b16 %v328
        %v373 = vunpack.c.h.b16 %v328
        %v374 = vunpack.c.l.b16 %v329
        %v375 = vunpack.c.h.b16 %v329
        %v376 = vunpack.c.l.b16 %v330
        %v377 = vunpack.c.h.b16 %v330
        %v378 = vunpack.c.l.b16 %v331
        %v379 = vunpack.c.h.b16 %v331
        %v380 = vunpack.c.l.b16 %v332
        %v381 = vunpack.c.h.b16 %v332
        %v382 = vunpack.c.l.b16 %v333
        %v383 = vunpack.c.h.b16 %v333
        %v384 = vunpack.c.l.b16 %v334
        %v385 = vunpack.c.h.b16 %v334
        %v386 = vunpack.c.l.b16 %v335
        %v387 = vunpack.c.h.b16 %v335
        %v388 = vunpack.c.l.b16 %v336
        %v389 = vunpack.c.h.b16 %v336
        %v390 = vunpack.c.l.b16 %v337
        %v391 = vunpack.c.h.b16 %v337
        %v392 = vunpack.c.l.b16 %v338
        %v393 = vunpack.c.h.b16 %v338
        %v394 = vunpack.c.l.b16 %v339
        %v395 = vunpack.c.h.b16 %v339
        %v396 = vunpack.c.l.b16 %v340
        %v397 = vunpack.c.h.b16 %v340
        %v398 = vunpack.c.l.b16 %v341
        %v399 = vunpack.c.h.b16 %v341
        %v400 = vunpack.c.l.b16 %v342
        %v401 = vunpack.c.h.b16 %v342
        %v402 = vunpack.c.l.b16 %v343
        %v403 = vunpack.c.h.b16 %v343
        %v404 = vpack.c.b16 %v374, %v372
        %v405 = vpack.c.b16 %v375, %v373
        %v406 = vpack.c.b16 %v378, %v376
        %v407 = vpack.c.b16 %v379, %v377
        %v408 = vpack.c.b16 %v382, %v380
        %v409 = vpack.c.b16 %v383, %v381
        %v410 = vpack.c.b16 %v386, %v384
        %v411 = vpack.c.b16 %v387, %v385
        %v412 = vpack.c.b16 %v390, %v388
        %v413 = vpack.c.b16 %v391, %v389
        %v414 = vpack.c.b16 %v394, %v392
        %v415 = vpack.c.b16 %v395, %v393
        %v416 = vpack.c.b16 %v398, %v396
        %v417 = vpack.c.b16 %v399, %v397
        %v418 = vpack.c.b16 %v402, %v400
        %v419 = vpack.c.b16 %v403, %v401
        %436 = vmatprep.subr.bf16.mxu0 %v405
        %437 = vmatpush1.bf16.msra.mxu0 %v404
        %438 = vmatprep.subr.bf16.mxu0 %v407
        %439 = vmatpush1.bf16.msra.mxu0 %v406
        %440 = vmatprep.subr.bf16.mxu0 %v409
        %441 = vmatpush1.bf16.msra.mxu0 %v408
        %442 = vmatprep.subr.bf16.mxu0 %v411
        %443 = vmatpush1.bf16.msra.mxu0 %v410
        %444 = vmatprep.subr.bf16.mxu0 %v413
        %445 = vmatpush1.bf16.msra.mxu0 %v412
        %446 = vmatprep.subr.bf16.mxu0 %v415
        %447 = vmatpush1.bf16.msra.mxu0 %v414
        %448 = vmatprep.subr.bf16.mxu0 %v417
        %449 = vmatpush1.bf16.msra.mxu0 %v416
        %450 = vmatprep.subr.bf16.mxu0 %v419
        %451 = vmatpush1.bf16.msra.mxu0 %v418
        %452 = vmatprep.subr.bf16.mxu0 0
        %453 = vmatpush1.bf16.msra.mxu0 0
        %454 = vmatprep.subr.bf16.mxu0 0
        %455 = vmatpush1.bf16.msra.mxu0 0
        %456 = vmatprep.subr.bf16.mxu0 0
        %457 = vmatpush1.bf16.msra.mxu0 0
        %458 = vmatprep.subr.bf16.mxu0 0
        %459 = vmatpush1.bf16.msra.mxu0 0
        %460 = vmatprep.subr.bf16.mxu0 0
        %461 = vmatpush1.bf16.msra.mxu0 0
        %462 = vmatprep.subr.bf16.mxu0 0
        %463 = vmatpush1.bf16.msra.mxu0 0
        %464 = vmatprep.subr.bf16.mxu0 0
        %465 = vmatpush1.bf16.msra.mxu0 0
        %466 = vmatprep.subr.bf16.mxu0 0
        %467 = vmatpush1.bf16.msra.mxu0 0
        %468 = vmatprep.mubr.bf16.mxu0 0
        %469 = vmatmul.mubr.bf16.gmra.mrb[0].mxu0 %v324
        %v470 = vpop.f32.mrb[0].mxu0
        %v471 = vadd.f32 %v349, %v470
        %v472 = vpop.f32.mrb[0].mxu0
        %v473 = vadd.f32 %v353, %v472
        %v474 = vpop.f32.mrb[0].mxu0
        %v475 = vadd.f32 %v349, %v474
        %v476 = vpop.f32.mrb[0].mxu0
        %v477 = vadd.f32 %v353, %v476
        %478 = vmatprep.mubr.bf16.mxu0 0
        %479 = vmatmul.mubr.bf16.gmra.mrb[0].mxu0 %v325
        %v480 = vpop.f32.mrb[0].mxu0
        %v481 = vadd.f32 %v349, %v480
        %v482 = vpop.f32.mrb[0].mxu0
        %v483 = vadd.f32 %v353, %v482
        %v484 = vpop.f32.mrb[0].mxu0
        %v485 = vadd.f32 %v349, %v484
        %v486 = vpop.f32.mrb[0].mxu0
        %v487 = vadd.f32 %v353, %v486
        %488 = vmatprep.mubr.bf16.mxu0 0
        %489 = vmatmul.mubr.bf16.gmra.mrb[0].mxu0 %v326
        %v490 = vpop.f32.mrb[0].mxu0
        %v491 = vadd.f32 %v349, %v490
        %v492 = vpop.f32.mrb[0].mxu0
        %v493 = vadd.f32 %v353, %v492
        %v494 = vpop.f32.mrb[0].mxu0
        %v495 = vadd.f32 %v349, %v494
        %v496 = vpop.f32.mrb[0].mxu0
        %v497 = vadd.f32 %v353, %v496
        %498 = vmatprep.mubr.bf16.mxu0 0
        %499 = vmatmul.mubr.bf16.gmra.mrb[0].mxu0 %v327
        %v500 = vpop.f32.mrb[0].mxu0
        %v501 = vadd.f32 %v349, %v500
        %v502 = vpop.f32.mrb[0].mxu0
        %v503 = vadd.f32 %v353, %v502
        %v504 = vpop.f32.mrb[0].mxu0
        %v505 = vadd.f32 %v349, %v504
        %v506 = vpop.f32.mrb[0].mxu0
        %v507 = vadd.f32 %v353, %v506
        %508 = vdwg.mxu0
        %v509 = vmax.f32 %v471, 0.0
        %v510 = vmax.f32 %v473, 0.0
        %v511 = vmax.f32 %v475, 0.0
        %v512 = vmax.f32 %v477, 0.0
        %v513 = vmax.f32 %v481, 0.0
        %v514 = vmax.f32 %v483, 0.0
        %v515 = vmax.f32 %v485, 0.0
        %v516 = vmax.f32 %v487, 0.0
        %v517 = vmax.f32 %v491, 0.0
        %v518 = vmax.f32 %v493, 0.0
        %v519 = vmax.f32 %v495, 0.0
        %v520 = vmax.f32 %v497, 0.0
        %v521 = vmax.f32 %v501, 0.0
        %v522 = vmax.f32 %v503, 0.0
        %v523 = vmax.f32 %v505, 0.0
        %v524 = vmax.f32 %v507, 0.0
        %v525 = vpack.c.bf16 %v511, %v509
        %v526 = vpack.c.bf16 %v512, %v510
        %v527 = vpack.c.bf16 %v515, %v513
        %v528 = vpack.c.bf16 %v516, %v514
        %v529 = vpack.c.bf16 %v519, %v517
        %v530 = vpack.c.bf16 %v520, %v518
        %v531 = vpack.c.bf16 %v523, %v521
        %v532 = vpack.c.bf16 %v524, %v522
        %v533 = vld [vmem:[#allocation8] sm:$0xf]
        %v534 = vld [vmem:[#allocation8 + $0x4] sm:$0xf]
        %v535 = vld [vmem:[#allocation8 + $0x8] sm:$0xf]
        %v536 = vld [vmem:[#allocation8 + $0xc] sm:$0xf]
        %v537 = vld [vmem:[#allocation8 + $0x10] sm:$0xf]
        %v538 = vld [vmem:[#allocation8 + $0x14] sm:$0xf]
        %v539 = vld [vmem:[#allocation8 + $0x18] sm:$0xf]
        %v540 = vld [vmem:[#allocation8 + $0x1c] sm:$0xf]
        %v541 = vld [vmem:[#allocation8 + $0x20] sm:$0xf]
        %v542 = vld [vmem:[#allocation8 + $0x24] sm:$0xf]
        %v543 = vld [vmem:[#allocation8 + $0x28] sm:$0xf]
        %v544 = vld [vmem:[#allocation8 + $0x2c] sm:$0xf]
        %v545 = vld [vmem:[#allocation8 + $0x30] sm:$0xf]
        %v546 = vld [vmem:[#allocation8 + $0x34] sm:$0xf]
        %v547 = vld [vmem:[#allocation8 + $0x38] sm:$0xf]
        %v548 = vld [vmem:[#allocation8 + $0x3c] sm:$0xf]
        %v549 = vld [vmem:[#allocation8 + $0x40] sm:$0xf]
        %v550 = vld [vmem:[#allocation8 + $0x44] sm:$0xf]
        %v551 = vld [vmem:[#allocation8 + $0x48] sm:$0xf]
        %v552 = vld [vmem:[#allocation8 + $0x4c] sm:$0xf]
        %v553 = vld [vmem:[#allocation8 + $0x50] sm:$0xf]
        %v554 = vld [vmem:[#allocation8 + $0x54] sm:$0xf]
        %v555 = vld [vmem:[#allocation8 + $0x58] sm:$0xf]
        %v556 = vld [vmem:[#allocation8 + $0x5c] sm:$0xf]
        %v557 = vld [vmem:[#allocation8 + $0x60] sm:$0xf]
        %v558 = vld [vmem:[#allocation8 + $0x64] sm:$0xf]
        %v559 = vld [vmem:[#allocation8 + $0x68] sm:$0xf]
        %v560 = vld [vmem:[#allocation8 + $0x6c] sm:$0xf]
        %v561 = vld [vmem:[#allocation8 + $0x70] sm:$0xf]
        %v562 = vld [vmem:[#allocation8 + $0x74] sm:$0xf]
        %v563 = vld [vmem:[#allocation8 + $0x78] sm:$0xf]
        %v564 = vld [vmem:[#allocation8 + $0x7c] sm:$0xf]
        %v565 = vld [vmem:[#allocation10] sm:$0x1]
        %v567 = vlaneseq
        %v568 = vshrl.u32 %v567, 7
        %v569 = vsub.s32 0, %v568
        %v570 = vrot.slane %v565, %v569
        %v604 = vunpack.c.l.b16 %v533
        %v605 = vunpack.c.l.b16 %v534
        %v606 = vunpack.c.l.b16 %v535
        %v607 = vunpack.c.l.b16 %v536
        %v608 = vunpack.c.l.b16 %v537
        %v609 = vunpack.c.l.b16 %v538
        %v610 = vunpack.c.l.b16 %v539
        %v611 = vunpack.c.l.b16 %v540
        %v612 = vunpack.c.l.b16 %v541
        %v613 = vunpack.c.l.b16 %v542
        %v614 = vunpack.c.l.b16 %v543
        %v615 = vunpack.c.l.b16 %v544
        %v616 = vunpack.c.l.b16 %v545
        %v617 = vunpack.c.l.b16 %v546
        %v618 = vunpack.c.l.b16 %v547
        %v619 = vunpack.c.l.b16 %v548
        %v620 = vunpack.c.l.b16 %v549
        %v621 = vunpack.c.l.b16 %v550
        %v622 = vunpack.c.l.b16 %v551
        %v623 = vunpack.c.l.b16 %v552
        %v624 = vunpack.c.l.b16 %v553
        %v625 = vunpack.c.l.b16 %v554
        %v626 = vunpack.c.l.b16 %v555
        %v627 = vunpack.c.l.b16 %v556
        %v628 = vunpack.c.l.b16 %v557
        %v629 = vunpack.c.l.b16 %v558
        %v630 = vunpack.c.l.b16 %v559
        %v631 = vunpack.c.l.b16 %v560
        %v632 = vunpack.c.l.b16 %v561
        %v633 = vunpack.c.l.b16 %v562
        %v634 = vunpack.c.l.b16 %v563
        %v635 = vunpack.c.l.b16 %v564
        %v636 = vpack.c.b16 %v605, %v604
        %v637 = vpack.c.b16 %v607, %v606
        %v638 = vpack.c.b16 %v609, %v608
        %v639 = vpack.c.b16 %v611, %v610
        %v640 = vpack.c.b16 %v613, %v612
        %v641 = vpack.c.b16 %v615, %v614
        %v642 = vpack.c.b16 %v617, %v616
        %v643 = vpack.c.b16 %v619, %v618
        %v644 = vpack.c.b16 %v621, %v620
        %v645 = vpack.c.b16 %v623, %v622
        %v646 = vpack.c.b16 %v625, %v624
        %v647 = vpack.c.b16 %v627, %v626
        %v648 = vpack.c.b16 %v629, %v628
        %v649 = vpack.c.b16 %v631, %v630
        %v650 = vpack.c.b16 %v633, %v632
        %v651 = vpack.c.b16 %v635, %v634
        %668 = vmatprep.subr.bf16.mxu0 0
        %669 = vmatpush1.bf16.msra.mxu0 %v636
        %670 = vmatprep.subr.bf16.mxu0 0
        %671 = vmatpush1.bf16.msra.mxu0 %v637
        %672 = vmatprep.subr.bf16.mxu0 0
        %673 = vmatpush1.bf16.msra.mxu0 %v638
        %674 = vmatprep.subr.bf16.mxu0 0
        %675 = vmatpush1.bf16.msra.mxu0 %v639
        %676 = vmatprep.subr.bf16.mxu0 0
        %677 = vmatpush1.bf16.msra.mxu0 %v640
        %678 = vmatprep.subr.bf16.mxu0 0
        %679 = vmatpush1.bf16.msra.mxu0 %v641
        %680 = vmatprep.subr.bf16.mxu0 0
        %681 = vmatpush1.bf16.msra.mxu0 %v642
        %682 = vmatprep.subr.bf16.mxu0 0
        %683 = vmatpush1.bf16.msra.mxu0 %v643
        %684 = vmatprep.subr.bf16.mxu0 0
        %685 = vmatpush1.bf16.msra.mxu0 %v644
        %686 = vmatprep.subr.bf16.mxu0 0
        %687 = vmatpush1.bf16.msra.mxu0 %v645
        %688 = vmatprep.subr.bf16.mxu0 0
        %689 = vmatpush1.bf16.msra.mxu0 %v646
        %690 = vmatprep.subr.bf16.mxu0 0
        %691 = vmatpush1.bf16.msra.mxu0 %v647
        %692 = vmatprep.subr.bf16.mxu0 0
        %693 = vmatpush1.bf16.msra.mxu0 %v648
        %694 = vmatprep.subr.bf16.mxu0 0
        %695 = vmatpush1.bf16.msra.mxu0 %v649
        %696 = vmatprep.subr.bf16.mxu0 0
        %697 = vmatpush1.bf16.msra.mxu0 %v650
        %698 = vmatprep.subr.bf16.mxu0 0
        %699 = vmatpush1.bf16.msra.mxu0 %v651
        %700 = vmatprep.mubr.bf16.mxu0 %v526
        %701 = vmatmul.mubr.bf16.gmra.mrb[0].mxu0 %v525
        %v702 = vpop.f32.mrb[0].mxu0
        %v703 = vadd.f32 %v570, %v702
        %v704 = vpop.f32.mrb[0].mxu0
        %v705 = vpop.f32.mrb[0].mxu0
        %v706 = vadd.f32 %v570, %v705
        %v707 = vpop.f32.mrb[0].mxu0
        %708 = vmatprep.mubr.bf16.mxu0 %v528
        %709 = vmatmul.mubr.bf16.gmra.mrb[0].mxu0 %v527
        %v710 = vpop.f32.mrb[0].mxu0
        %v711 = vadd.f32 %v570, %v710
        %v712 = vpop.f32.mrb[0].mxu0
        %v713 = vpop.f32.mrb[0].mxu0
        %v714 = vadd.f32 %v570, %v713
        %v715 = vpop.f32.mrb[0].mxu0
        %716 = vmatprep.mubr.bf16.mxu0 %v530
        %717 = vmatmul.mubr.bf16.gmra.mrb[0].mxu0 %v529
        %v718 = vpop.f32.mrb[0].mxu0
        %v719 = vadd.f32 %v570, %v718
        %v720 = vpop.f32.mrb[0].mxu0
        %v721 = vpop.f32.mrb[0].mxu0
        %v722 = vadd.f32 %v570, %v721
        %v723 = vpop.f32.mrb[0].mxu0
        %724 = vmatprep.mubr.bf16.mxu0 %v532
        %725 = vmatmul.mubr.bf16.gmra.mrb[0].mxu0 %v531
        %v726 = vpop.f32.mrb[0].mxu0
        %v727 = vadd.f32 %v570, %v726
        %v728 = vpop.f32.mrb[0].mxu0
        %v729 = vpop.f32.mrb[0].mxu0
        %v730 = vadd.f32 %v570, %v729
        %v731 = vpop.f32.mrb[0].mxu0
        %732 = vdwg.mxu0
        %v733 = vmul.f32 %v703, %v703
        %v734 = vmul.f32 %v706, %v706
        %v735 = vmul.f32 %v711, %v711
        %v736 = vmul.f32 %v714, %v714
        %v737 = vmul.f32 %v719, %v719
        %v738 = vmul.f32 %v722, %v722
        %v739 = vmul.f32 %v727, %v727
        %v740 = vmul.f32 %v730, %v730
        %741 = vadd.xlane.f32.xlu0 %v733
        %v742 = vpop.xlane.xlu0 %741
        %743 = vadd.xlane.f32.xlu0 %v734
        %v744 = vpop.xlane.xlu0 %743
        %745 = vadd.xlane.f32.xlu0 %v735
        %v746 = vpop.xlane.xlu0 %745
        %747 = vadd.xlane.f32.xlu0 %v736
        %v748 = vpop.xlane.xlu0 %747
        %749 = vadd.xlane.f32.xlu0 %v737
        %v750 = vpop.xlane.xlu0 %749
        %751 = vadd.xlane.f32.xlu0 %v738
        %v752 = vpop.xlane.xlu0 %751
        %753 = vadd.xlane.f32.xlu0 %v739
        %v754 = vpop.xlane.xlu0 %753
        %755 = vadd.xlane.f32.xlu0 %v740
        %v756 = vpop.xlane.xlu0 %755
        %v757 = vmax.f32 %v742, 1e-24
        %v758 = vmax.f32 %v744, 1e-24
        %v759 = vmax.f32 %v746, 1e-24
        %v760 = vmax.f32 %v748, 1e-24
        %v761 = vmax.f32 %v750, 1e-24
        %v762 = vmax.f32 %v752, 1e-24
        %v763 = vmax.f32 %v754, 1e-24
        %v764 = vmax.f32 %v756, 1e-24
        %v765 = vrsqrt.pop %v757
        %v766 = vrsqrt.pop %v758
        %v767 = vrsqrt.pop %v759
        %v768 = vrsqrt.pop %v760
        %v769 = vrsqrt.pop %v761
        %v770 = vrsqrt.pop %v762
        %v771 = vrsqrt.pop %v763
        %v772 = vrsqrt.pop %v764
        %v773 = vmul.f32 %v703, %v765
        %v774 = vmul.f32 %v706, %v766
        %v775 = vmul.f32 %v711, %v767
        %v776 = vmul.f32 %v714, %v768
        %v777 = vmul.f32 %v719, %v769
        %v778 = vmul.f32 %v722, %v770
        %v779 = vmul.f32 %v727, %v771
        %v780 = vmul.f32 %v730, %v772
        %s781 = scalar_lea.vmem %s272, 64 [#allocation2]
        %v782 = vld [vmem:[%s781] sm:$0xff]
        %v783 = vld [vmem:[%s781 + $0x8] sm:$0xff]
        %v784 = vld [vmem:[%s781 + $0x10] sm:$0xff]
        %v785 = vld [vmem:[%s781 + $0x18] sm:$0xff]
        %v786 = vld [vmem:[%s781 + $0x20] sm:$0xff]
        %v787 = vld [vmem:[%s781 + $0x28] sm:$0xff]
        %v788 = vld [vmem:[%s781 + $0x30] sm:$0xff]
        %v789 = vld [vmem:[%s781 + $0x38] sm:$0xff]
        %v790 = vpack.c.bf16 %v783, %v782
        %v791 = vpack.c.bf16 %v785, %v784
        %v792 = vpack.c.bf16 %v787, %v786
        %v793 = vpack.c.bf16 %v789, %v788
        %794 = vmatprep.subr.bf16.mxu0 %v405
        %795 = vmatpush1.bf16.msra.mxu0 %v404
        %796 = vmatprep.subr.bf16.mxu0 %v407
        %797 = vmatpush1.bf16.msra.mxu0 %v406
        %798 = vmatprep.subr.bf16.mxu0 %v409
        %799 = vmatpush1.bf16.msra.mxu0 %v408
        %800 = vmatprep.subr.bf16.mxu0 %v411
        %801 = vmatpush1.bf16.msra.mxu0 %v410
        %802 = vmatprep.subr.bf16.mxu0 %v413
        %803 = vmatpush1.bf16.msra.mxu0 %v412
        %804 = vmatprep.subr.bf16.mxu0 %v415
        %805 = vmatpush1.bf16.msra.mxu0 %v414
        %806 = vmatprep.subr.bf16.mxu0 %v417
        %807 = vmatpush1.bf16.msra.mxu0 %v416
        %808 = vmatprep.subr.bf16.mxu0 %v419
        %809 = vmatpush1.bf16.msra.mxu0 %v418
        %810 = vmatprep.subr.bf16.mxu0 0
        %811 = vmatpush1.bf16.msra.mxu0 0
        %812 = vmatprep.subr.bf16.mxu0 0
        %813 = vmatpush1.bf16.msra.mxu0 0
        %814 = vmatprep.subr.bf16.mxu0 0
        %815 = vmatpush1.bf16.msra.mxu0 0
        %816 = vmatprep.subr.bf16.mxu0 0
        %817 = vmatpush1.bf16.msra.mxu0 0
        %818 = vmatprep.subr.bf16.mxu0 0
        %819 = vmatpush1.bf16.msra.mxu0 0
        %820 = vmatprep.subr.bf16.mxu0 0
        %821 = vmatpush1.bf16.msra.mxu0 0
        %822 = vmatprep.subr.bf16.mxu0 0
        %823 = vmatpush1.bf16.msra.mxu0 0
        %824 = vmatprep.subr.bf16.mxu0 0
        %825 = vmatpush1.bf16.msra.mxu0 0
        %826 = vmatprep.mubr.bf16.mxu0 0
        %827 = vmatmul.mubr.bf16.gmra.mrb[0].mxu0 %v790
        %v828 = vpop.f32.mrb[0].mxu0
        %v829 = vadd.f32 %v349, %v828
        %v830 = vpop.f32.mrb[0].mxu0
        %v831 = vadd.f32 %v353, %v830
        %v832 = vpop.f32.mrb[0].mxu0
        %v833 = vadd.f32 %v349, %v832
        %v834 = vpop.f32.mrb[0].mxu0
        %v835 = vadd.f32 %v353, %v834
        %836 = vmatprep.mubr.bf16.mxu0 0
        %837 = vmatmul.mubr.bf16.gmra.mrb[0].mxu0 %v791
        %v838 = vpop.f32.mrb[0].mxu0
        %v839 = vadd.f32 %v349, %v838
        %v840 = vpop.f32.mrb[0].mxu0
        %v841 = vadd.f32 %v353, %v840
        %v842 = vpop.f32.mrb[0].mxu0
        %v843 = vadd.f32 %v349, %v842
        %v844 = vpop.f32.mrb[0].mxu0
        %v845 = vadd.f32 %v353, %v844
        %846 = vmatprep.mubr.bf16.mxu0 0
        %847 = vmatmul.mubr.bf16.gmra.mrb[0].mxu0 %v792
        %v848 = vpop.f32.mrb[0].mxu0
        %v849 = vadd.f32 %v349, %v848
        %v850 = vpop.f32.mrb[0].mxu0
        %v851 = vadd.f32 %v353, %v850
        %v852 = vpop.f32.mrb[0].mxu0
        %v853 = vadd.f32 %v349, %v852
        %v854 = vpop.f32.mrb[0].mxu0
        %v855 = vadd.f32 %v353, %v854
        %856 = vmatprep.mubr.bf16.mxu0 0
        %857 = vmatmul.mubr.bf16.gmra.mrb[0].mxu0 %v793
        %v858 = vpop.f32.mrb[0].mxu0
        %v859 = vadd.f32 %v349, %v858
        %v860 = vpop.f32.mrb[0].mxu0
        %v861 = vadd.f32 %v353, %v860
        %v862 = vpop.f32.mrb[0].mxu0
        %v863 = vadd.f32 %v349, %v862
        %v864 = vpop.f32.mrb[0].mxu0
        %v865 = vadd.f32 %v353, %v864
        %866 = vdwg.mxu0
        %v867 = vmax.f32 %v829, 0.0
        %v868 = vmax.f32 %v831, 0.0
        %v869 = vmax.f32 %v833, 0.0
        %v870 = vmax.f32 %v835, 0.0
        %v871 = vmax.f32 %v839, 0.0
        %v872 = vmax.f32 %v841, 0.0
        %v873 = vmax.f32 %v843, 0.0
        %v874 = vmax.f32 %v845, 0.0
        %v875 = vmax.f32 %v849, 0.0
        %v876 = vmax.f32 %v851, 0.0
        %v877 = vmax.f32 %v853, 0.0
        %v878 = vmax.f32 %v855, 0.0
        %v879 = vmax.f32 %v859, 0.0
        %v880 = vmax.f32 %v861, 0.0
        %v881 = vmax.f32 %v863, 0.0
        %v882 = vmax.f32 %v865, 0.0
        %v883 = vpack.c.bf16 %v869, %v867
        %v884 = vpack.c.bf16 %v870, %v868
        %v885 = vpack.c.bf16 %v873, %v871
        %v886 = vpack.c.bf16 %v874, %v872
        %v887 = vpack.c.bf16 %v877, %v875
        %v888 = vpack.c.bf16 %v878, %v876
        %v889 = vpack.c.bf16 %v881, %v879
        %v890 = vpack.c.bf16 %v882, %v880
        %891 = vmatprep.subr.bf16.mxu0 0
        %892 = vmatpush1.bf16.msra.mxu0 %v636
        %893 = vmatprep.subr.bf16.mxu0 0
        %894 = vmatpush1.bf16.msra.mxu0 %v637
        %895 = vmatprep.subr.bf16.mxu0 0
        %896 = vmatpush1.bf16.msra.mxu0 %v638
        %897 = vmatprep.subr.bf16.mxu0 0
        %898 = vmatpush1.bf16.msra.mxu0 %v639
        %899 = vmatprep.subr.bf16.mxu0 0
        %900 = vmatpush1.bf16.msra.mxu0 %v640
        %901 = vmatprep.subr.bf16.mxu0 0
        %902 = vmatpush1.bf16.msra.mxu0 %v641
        %903 = vmatprep.subr.bf16.mxu0 0
        %904 = vmatpush1.bf16.msra.mxu0 %v642
        %905 = vmatprep.subr.bf16.mxu0 0
        %906 = vmatpush1.bf16.msra.mxu0 %v643
        %907 = vmatprep.subr.bf16.mxu0 0
        %908 = vmatpush1.bf16.msra.mxu0 %v644
        %909 = vmatprep.subr.bf16.mxu0 0
        %910 = vmatpush1.bf16.msra.mxu0 %v645
        %911 = vmatprep.subr.bf16.mxu0 0
        %912 = vmatpush1.bf16.msra.mxu0 %v646
        %913 = vmatprep.subr.bf16.mxu0 0
        %914 = vmatpush1.bf16.msra.mxu0 %v647
        %915 = vmatprep.subr.bf16.mxu0 0
        %916 = vmatpush1.bf16.msra.mxu0 %v648
        %917 = vmatprep.subr.bf16.mxu0 0
        %918 = vmatpush1.bf16.msra.mxu0 %v649
        %919 = vmatprep.subr.bf16.mxu0 0
        %920 = vmatpush1.bf16.msra.mxu0 %v650
        %921 = vmatprep.subr.bf16.mxu0 0
        %922 = vmatpush1.bf16.msra.mxu0 %v651
        %923 = vmatprep.mubr.bf16.mxu0 %v884
        %924 = vmatmul.mubr.bf16.gmra.mrb[0].mxu0 %v883
        %v925 = vpop.f32.mrb[0].mxu0
        %v926 = vadd.f32 %v570, %v925
        %v927 = vpop.f32.mrb[0].mxu0
        %v928 = vpop.f32.mrb[0].mxu0
        %v929 = vadd.f32 %v570, %v928
        %v930 = vpop.f32.mrb[0].mxu0
        %931 = vmatprep.mubr.bf16.mxu0 %v886
        %932 = vmatmul.mubr.bf16.gmra.mrb[0].mxu0 %v885
        %v933 = vpop.f32.mrb[0].mxu0
        %v934 = vadd.f32 %v570, %v933
        %v935 = vpop.f32.mrb[0].mxu0
        %v936 = vpop.f32.mrb[0].mxu0
        %v937 = vadd.f32 %v570, %v936
        %v938 = vpop.f32.mrb[0].mxu0
        %939 = vmatprep.mubr.bf16.mxu0 %v888
        %940 = vmatmul.mubr.bf16.gmra.mrb[0].mxu0 %v887
        %v941 = vpop.f32.mrb[0].mxu0
        %v942 = vadd.f32 %v570, %v941
        %v943 = vpop.f32.mrb[0].mxu0
        %v944 = vpop.f32.mrb[0].mxu0
        %v945 = vadd.f32 %v570, %v944
        %v946 = vpop.f32.mrb[0].mxu0
        %947 = vmatprep.mubr.bf16.mxu0 %v890
        %948 = vmatmul.mubr.bf16.gmra.mrb[0].mxu0 %v889
        %v949 = vpop.f32.mrb[0].mxu0
        %v950 = vadd.f32 %v570, %v949
        %v951 = vpop.f32.mrb[0].mxu0
        %v952 = vpop.f32.mrb[0].mxu0
        %v953 = vadd.f32 %v570, %v952
        %v954 = vpop.f32.mrb[0].mxu0
        %955 = vdwg.mxu0
        %v956 = vmul.f32 %v926, %v926
        %v957 = vmul.f32 %v929, %v929
        %v958 = vmul.f32 %v934, %v934
        %v959 = vmul.f32 %v937, %v937
        %v960 = vmul.f32 %v942, %v942
        %v961 = vmul.f32 %v945, %v945
        %v962 = vmul.f32 %v950, %v950
        %v963 = vmul.f32 %v953, %v953
        %964 = vadd.xlane.f32.xlu0 %v956
        %v965 = vpop.xlane.xlu0 %964
        %966 = vadd.xlane.f32.xlu0 %v957
        %v967 = vpop.xlane.xlu0 %966
        %968 = vadd.xlane.f32.xlu0 %v958
        %v969 = vpop.xlane.xlu0 %968
        %970 = vadd.xlane.f32.xlu0 %v959
        %v971 = vpop.xlane.xlu0 %970
        %972 = vadd.xlane.f32.xlu0 %v960
        %v973 = vpop.xlane.xlu0 %972
        %974 = vadd.xlane.f32.xlu0 %v961
        %v975 = vpop.xlane.xlu0 %974
        %976 = vadd.xlane.f32.xlu0 %v962
        %v977 = vpop.xlane.xlu0 %976
        %978 = vadd.xlane.f32.xlu0 %v963
        %v979 = vpop.xlane.xlu0 %978
        %v980 = vmax.f32 %v965, 1e-24
        %v981 = vmax.f32 %v967, 1e-24
        %v982 = vmax.f32 %v969, 1e-24
        %v983 = vmax.f32 %v971, 1e-24
        %v984 = vmax.f32 %v973, 1e-24
        %v985 = vmax.f32 %v975, 1e-24
        %v986 = vmax.f32 %v977, 1e-24
        %v987 = vmax.f32 %v979, 1e-24
        %v988 = vrsqrt.pop %v980
        %v989 = vrsqrt.pop %v981
        %v990 = vrsqrt.pop %v982
        %v991 = vrsqrt.pop %v983
        %v992 = vrsqrt.pop %v984
        %v993 = vrsqrt.pop %v985
        %v994 = vrsqrt.pop %v986
        %v995 = vrsqrt.pop %v987
        %v996 = vmul.f32 %v926, %v988
        %v997 = vmul.f32 %v929, %v989
        %v998 = vmul.f32 %v934, %v990
        %v999 = vmul.f32 %v937, %v991
        %v1000 = vmul.f32 %v942, %v992
        %v1001 = vmul.f32 %v945, %v993
        %v1002 = vmul.f32 %v950, %v994
        %v1003 = vmul.f32 %v953, %v995
        %v1004 = vsub.f32 %v773, %v996
        %v1005 = vsub.f32 %v774, %v997
        %v1006 = vsub.f32 %v775, %v998
        %v1007 = vsub.f32 %v776, %v999
        %v1008 = vsub.f32 %v777, %v1000
        %v1009 = vsub.f32 %v778, %v1001
        %v1010 = vsub.f32 %v779, %v1002
        %v1011 = vsub.f32 %v780, %v1003
        %v1012 = vmul.f32 %v1004, %v1004
        %v1013 = vmul.f32 %v1005, %v1005
        %v1014 = vmul.f32 %v1006, %v1006
        %v1015 = vmul.f32 %v1007, %v1007
        %v1016 = vmul.f32 %v1008, %v1008
        %v1017 = vmul.f32 %v1009, %v1009
        %v1018 = vmul.f32 %v1010, %v1010
        %v1019 = vmul.f32 %v1011, %v1011
        %v1020 = vadd.f32 %v1012, %v1013
        %v1021 = vadd.f32 %v1020, %v1014
        %v1022 = vadd.f32 %v1021, %v1015
        %v1023 = vadd.f32 %v1022, %v1016
        %v1024 = vadd.f32 %v1023, %v1017
        %v1025 = vadd.f32 %v1024, %v1018
        %v1026 = vadd.f32 %v1025, %v1019
        %v1027 = vrot.slane %v1026, 4
        %v1028 = vadd.f32 %v1026, %v1027
        %v1029 = vrot.slane %v1028, 2
        %v1030 = vadd.f32 %v1028, %v1029
        %v1031 = vrot.slane %v1030, 1
        %v1032 = vadd.f32 %v1030, %v1031
        %v1033 = vadd.f32 %v1032, 0.0
        %1034 = vst [vmem:[%s313] sm:$0x1] %v1033
        %s1035 = sand.u32 %s158, 1
        %s1036 = scalar_lea.sflag [#allocation4], %s1035
        %s1037 = sand.u32 %s158, 1
        %s1038 = scalar_lea.vmem [#allocation11], %s1037
        // Predicated region
        $region61: #{local_alignment_loss.1} parent=39 // pred_check
          %p1039 = pneg %p168
        $region62: #{local_alignment_loss.1} parent=39 // pred_check_branch
          %1041 = sbr.rel (%p1039) target = $region64
        $region63: #{local_alignment_loss.1} parent=39 // pred_region
          %s1043 = ssub.s32 16, 16
          %1044 = vsyncadd %s1036, %s1043
          %s1045 = sadd.s32 %s29, %s28
          %s1046 = smul.addr %s1045, 16
          %s1047 = scalar_lea.hbm %s5, %s1046
          %s1049 = sshll.u32 %s1038, 4
          %s1050 = int_to_ptr.vmem [resolvable:$true] %s1049
          %1052 = dma.vmem_to_hbm [thread:$0]  %s1050, 16, %s1047, %s1036
        $region64: #{local_alignment_loss.1} parent=39 // pred_fallthru
          _
      $region40: #{local_alignment_loss.1} parent=5 // pred_fallthru
        _
      %p1053 = scmp.le.s32.totalorder 2, %s19
      // Predicated region
      $region65: #{local_alignment_loss.1} parent=5 // pred_check
        %p1054 = pneg %p1053
      $region66: #{local_alignment_loss.1} parent=5 // pred_check_branch
        %1056 = sbr.rel (%p1054) target = $region68
      $region67: #{local_alignment_loss.1} parent=5 // pred_region
        %s1057 = ssub.s32 %s19, 2
        // Predicated region
        $region69: #{local_alignment_loss.1} parent=67 // pred_check
          %p1058 = pneg %p174
        $region70: #{local_alignment_loss.1} parent=67 // pred_check_branch
          %1060 = sbr.rel (%p1058) target = $region72
        $region71: #{local_alignment_loss.1} parent=67 // pred_region
          %s1061 = sand.u32 %s159, 1
          %s1062 = scalar_lea.sflag [#allocation4], %s1061
          %s1063 = sand.u32 %s159, 1
          %s1064 = scalar_lea.vmem [#allocation11], %s1063
          %1065 = dma.done %s1062, 16
        $region72: #{local_alignment_loss.1} parent=67 // pred_fallthru
          _
      $region68: #{local_alignment_loss.1} parent=5 // pred_fallthru
        _
    $region6: #{local_alignment_loss.1} parent=1 // loop_footer
      %s23 = sadd.s32 1, %s19
    $region7: #{local_alignment_loss.1} parent=1 // loop_footer_branch
      %18 = sbr.rel target = $region3
    $region8: #{local_alignment_loss.1} parent=1 // loop_exit
      _
    %1066 = vsyncpa [#allocation3], 1
    %s1067 = scalar_lea.sflag [#allocation3], 1
    %1068 = vsyncpa %s1067, 1
    %1069 = vsyncpa [#allocation6], 1
    %1070 = vsyncpa [#allocation9], 1
    %1071 = vsyncpa [#allocation4], 1
    %s1072 = scalar_lea.sflag [#allocation4], 1
    %1073 = vsyncpa %s1072, 1

</llo_original>
